<compile_context>
chip_gen: v7x
topology: tpu7x:2x2x1
jax: 0.10.0
libtpu: 0.0.40
codegen_flags: <defaults>
</compile_context>

<pallas_src>
import functools
import numpy as np
import jax
import jax.numpy as jnp
from jax.experimental import pallas as pl
from jax.experimental.pallas import tpu as pltpu

# ----------------------------- synthetic config -----------------------------
CT_RES = 16          # metadata['ct_res']
FEATURE_RES = 8      # metadata['feature_res']
FSTEP = CT_RES // FEATURE_RES
AXIS_EMB_DIM = 5     # metadata['axis_emb_dim']
HIDDEN = 32          # hidden width of the synthetic PerspectiveINRNet MLP
OUTPUT_CH = 1        # network_fn.output_ch
IN_CH = 3 + AXIS_EMB_DIM   # 'before_inr' axis embedding concatenated to xyz
LANE = 128           # TPU lane width; point axis is padded to a multiple of this


# ----------------------------- parameter init -------------------------------
def init_params(key):
    ks = jax.random.split(key, 4)
    params = {}
    # nn.Embedding(3, axis_emb_dim)
    params['axis_emb'] = jax.random.normal(ks[0], (3, AXIS_EMB_DIM), jnp.float32)

    def linear(k, fan_in, fan_out):
        kw, _ = jax.random.split(k)
        w = jax.random.normal(kw, (fan_in, fan_out), jnp.float32) / np.sqrt(fan_in)
        b = jnp.zeros((1, fan_out), jnp.float32)
        return w, b

    # TODO(synk): real PerspectiveINRNet internals unknown; 3-layer ReLU MLP stand-in
    params['w1'], params['b1'] = linear(ks[1], IN_CH, HIDDEN)
    params['w2'], params['b2'] = linear(ks[2], HIDDEN, HIDDEN)
    params['w3'], params['b3'] = linear(ks[3], HIDDEN, OUTPUT_CH)
    return params


# ---------------- fused Pallas kernel: NeRF MLP + bilinear resample ----------------
def fused_kernel(x_t_ref, w1t_ref, b1_ref, w2t_ref, b2_ref, w3t_ref, b3_ref,
                 imgs_ref, wrow_ref, wcolT_ref,
                 out_t_ref, resamp_ref):
    # --- per-point MLP, transposed: activations are (hidden, N_points) so the
    #     128-wide point axis is the lane axis and the output store (1, Npad)
    #     is lane-dense (no masked vst on a 1-lane-wide column). ---
    h = jnp.dot(w1t_ref[...], x_t_ref[...], preferred_element_type=jnp.float32) + b1_ref[...]
    h = jnp.maximum(h, 0.0)
    h = jnp.dot(w2t_ref[...], h, preferred_element_type=jnp.float32) + b2_ref[...]
    h = jnp.maximum(h, 0.0)
    out_t_ref[...] = (jnp.dot(w3t_ref[...], h, preferred_element_type=jnp.float32)
                      + b3_ref[...]).astype(out_t_ref.dtype)

    # --- bilinear grid_sample as two MXU matmuls per batch element:
    #     out[b] = Wrow @ img[b] @ WcolT.  B is static -> unrolled at trace time,
    #     so the whole resample lives in the same single kernel invocation. ---
    B = imgs_ref.shape[0]
    for b in range(B):
        tmp = jnp.dot(wrow_ref[...], imgs_ref[b], preferred_element_type=jnp.float32)
        resamp_ref[b] = jnp.dot(tmp, wcolT_ref[...],
                                preferred_element_type=jnp.float32).astype(resamp_ref.dtype)


def fused_mlp_and_resample(x_t, w1t, b1t, w2t, b2t, w3t, b3t, imgs, wrow, wcolT):
    """Single grid-less pallas_call: everything is tiny and fully VMEM-resident."""
    npad = x_t.shape[1]
    B = imgs.shape[0]
    Hout, Wout = wrow.shape[0], wcolT.shape[1]
    vmem = pl.BlockSpec(memory_space=pltpu.MemorySpace.VMEM)
    return pl.pallas_call(
        fused_kernel,
        out_shape=(
            jax.ShapeDtypeStruct((OUTPUT_CH, npad), jnp.float32),   # lane-dense MLP output
            jax.ShapeDtypeStruct((B, Hout, Wout), jnp.float32),     # resampled gt CT slice
        ),
        in_specs=[vmem] * 10,
        out_specs=(vmem, vmem),
    )(x_t, w1t, b1t, w2t, b2t, w3t, b3t, imgs, wrow, wcolT)


# ------------------- bilinear interp matrices (host, cached) -----------------
@functools.lru_cache(maxsize=None)
def build_interp_matrices(p0, zoom_size, in_res, out_res):
    """Replicates rendering_from_ctslice coordinate math (align_corners=True,
    padding_mode='zeros') and returns bilinear interpolation matrices.
    Pure host/numpy; depends only on (p0, zoom_size, resolutions) -> cached."""
    in_h, in_w = in_res
    p1 = [p0[0] + zoom_size - 1.0, p0[1] + zoom_size - 1.0]
    p0s = [p / (out_res - 1) * (ir - 1) for p, ir in zip(p0, (in_h, in_w))]
    p1s = [p / (out_res - 1) * (ir - 1) for p, ir in zip(p1, (in_h, in_w))]
    p0n = [p / (ir - 1) * 2 - 1 for p, ir in zip(p0s, (in_h, in_w))]
    p1n = [p / (ir - 1) * 2 - 1 for p, ir in zip(p1s, (in_h, in_w))]
    lin0 = np.linspace(p0n[0], p1n[0], out_res)  # grid x-coord -> input W
    lin1 = np.linspace(p0n[1], p1n[1], out_res)  # grid y-coord -> input H

    def interp_matrix(coords_norm, size):
        idx = (coords_norm + 1.0) / 2.0 * (size - 1)
        lo = np.floor(idx).astype(np.int64)
        hi = lo + 1
        w_hi = idx - lo
        w_lo = 1.0 - w_hi
        M = np.zeros((len(coords_norm), size), dtype=np.float32)
        for k in range(len(coords_norm)):
            if 0 <= lo[k] < size:
                M[k, lo[k]] += w_lo[k]
            if 0 <= hi[k] < size:
                M[k, hi[k]] += w_hi[k]
        return M

    # After the module's .permute(0,1,3,2): result[i,j] samples input at
    # row from lin1[i] and column from lin0[j].
    Wrow = interp_matrix(lin1, in_h)      # (out_res, in_h)
    Wcol = interp_matrix(lin0, in_w)      # (out_res, in_w)
    return jnp.asarray(Wrow), jnp.asarray(Wcol.T)


# ----------------------- feature point construction (glue) ------------------
def get_feature_points(slice_idx, recon_axis, p0, zoom_size, axis_emb):
    ct_res_f = float(CT_RES)
    lin = jnp.arange(CT_RES, dtype=jnp.float32)               # linspace(0, ct_res-1)
    g0, g1, g2 = jnp.meshgrid(lin, lin, lin, indexing='ij')
    pts_gt = jnp.stack([g0, g1, g2], axis=-1)                 # (R, R, R, 3)
    center = (CT_RES - 1) / 2.0
    pts = (pts_gt - center) / ct_res_f                        # gt2world (max world len = 1)

    if recon_axis == 'sagittal':
        emb = axis_emb[0]
        fp = pts[::FSTEP, ::FSTEP, slice_idx:slice_idx + 1, :]          # (F, F, 1, 3)
        offset = (fp[1, 1, :, :] - fp[0, 0, :, :]) * (FSTEP - 1) / FSTEP
        fp = fp + offset / 2
        corner = fp[0, 0, 0, :2]
        shift = corner * (zoom_size / ct_res_f) - corner
        fp = fp.at[..., 0].set(fp[..., 0] * (zoom_size / ct_res_f) + p0[0] / ct_res_f - shift[0])
        fp = fp.at[..., 1].set(fp[..., 1] * (zoom_size / ct_res_f) + p0[1] / ct_res_f - shift[1])
    elif recon_axis == 'coronal':
        emb = axis_emb[1]
        fp = pts[::FSTEP, slice_idx:slice_idx + 1, ::FSTEP, :]          # (F, 1, F, 3)
        offset = (fp[1, :, 1, :] - fp[0, :, 0, :]) * (FSTEP - 1) / FSTEP
        fp = fp + offset / 2
        corner = fp[0, 0, 0, 0:3:2]
        shift = corner * (zoom_size / ct_res_f) - corner
        fp = fp.at[..., 0].set(fp[..., 0] * (zoom_size / ct_res_f) + p0[0] / ct_res_f - shift[0])
        fp = fp.at[..., 2].set(fp[..., 2] * (zoom_size / ct_res_f) + p0[1] / ct_res_f - shift[1])
        fp = jnp.transpose(fp, (0, 2, 1, 3))
    else:  # axial
        emb = axis_emb[2]
        fp = pts[slice_idx:slice_idx + 1, ::FSTEP, ::FSTEP, :]          # (1, F, F, 3)
        offset = (fp[:, 1, 1, :] - fp[:, 0, 0, :]) * (FSTEP - 1) / FSTEP
        fp = fp + offset / 2
        corner = fp[0, 0, 0, 1:]
        shift = corner * (zoom_size / ct_res_f) - corner
        fp = fp.at[..., 1].set(fp[..., 1] * (zoom_size / ct_res_f) + p0[0] / ct_res_f - shift[0])
        fp = fp.at[..., 2].set(fp[..., 2] * (zoom_size / ct_res_f) + p0[1] / ct_res_f - shift[1])
        fp = jnp.transpose(fp, (1, 2, 0, 3))

    F_, _, N_, _ = fp.shape
    emb_b = jnp.broadcast_to(emb, (F_, F_, N_, AXIS_EMB_DIM))
    return jnp.concatenate([fp, emb_b], axis=-1)              # (F, F, 1, 3+emb)


# --------------------------------- forward ----------------------------------
@functools.partial(jax.jit,
                   static_argnames=("recon_axes", "slice_idxs", "p0", "zoom_size"))
def inr_encoder_forward(params, image, wrow, wcolT, *, recon_axes, slice_idxs,
                        p0, zoom_size):
    B, C, H_img, W_img = image.shape
    assert C == 1, "synthetic config uses a single-channel CT slice"

    # get_rays_for_no_rendering: transformed feature points + axis embedding.
    # Python loop runs at trace time only; jit caches per static (axes, idxs).
    fps = [get_feature_points(slice_idxs[b], recon_axes[b], p0, zoom_size,
                              params['axis_emb']) for b in range(B)]
    tfp = jnp.stack(fps, axis=0)                              # (B, H, W, Ns, coord)
    _, H, W, Ns, coord_dim = tfp.shape
    N = B * H * W * Ns
    npad = ((N + LANE - 1) // LANE) * LANE                    # lane-align the point axis

    # Transpose so the point axis is the (fast) lane axis inside the kernel.
    x_t = tfp.reshape(N, coord_dim).T                         # (coord, N)
    if npad != N:
        x_t = jnp.pad(x_t, ((0, 0), (0, npad - N)))

    # Single fused pallas_call: run_nerf MLP + rendering_from_ctslice resample.
    # TODO(synk): latent_zs from network_fn.encode() (pixel-aligned cond encoder)
    # omitted: cond_list is empty in this synthetic config.
    out_t, resampled = fused_mlp_and_resample(
        x_t,
        params['w1'].T, params['b1'].T,
        params['w2'].T, params['b2'].T,
        params['w3'].T, params['b3'].T,
        image[:, 0, :, :], wrow, wcolT)

    # Undo the transpose / padding and match the reference reshape chain.
    out_flat = out_t[:, :N].T                                 # (N, out_ch)
    out = out_flat.reshape(B, H * W * Ns, OUTPUT_CH)
    out = jnp.transpose(out, (0, 2, 1)).reshape(B, -1, H, W)  # (B, out_ch*Ns, H, W)

    cropped = jnp.tile(resampled[:, None, :, :], (1, 3, 1, 1))  # .repeat(1,3,1,1)
    return {'outputs': out, 'cropped_ctslice': cropped}


# ----------------------------------- main ------------------------------------
if __name__ == "__main__":
    key = jax.random.PRNGKey(0)
    pkey, ikey = jax.random.split(key)
    params = init_params(pkey)

    B = 2
    image = jax.random.normal(ikey, (B, 1, CT_RES, CT_RES), jnp.float32)
    recon_axes = ('sagittal', 'coronal')      # parsed from file_path_ in the module
    slice_idxs = (5, 3)
    p0 = (0.0, 0.0)
    zoom_size = float(CT_RES)                 # deterministic (random zoom disabled)

    # Interp matrices depend only on (p0, zoom_size, resolutions): host-cached,
    # computed once outside the jitted forward.
    wrow, wcolT = build_interp_matrices(p0, zoom_size, (CT_RES, CT_RES), CT_RES)

    outs = inr_encoder_forward(params, image, wrow, wcolT,
                               recon_axes=recon_axes, slice_idxs=slice_idxs,
                               p0=p0, zoom_size=zoom_size)
    jax.block_until_ready(outs['outputs'])
    jax.block_until_ready(outs['cropped_ctslice'])

    assert outs['outputs'].shape == (B, OUTPUT_CH * 1, FEATURE_RES, FEATURE_RES)
    assert outs['cropped_ctslice'].shape == (B, 3, CT_RES, CT_RES)
    print("KERNEL_OK")
</pallas_src>

<mosaic_0001>
module attributes {stable_mosaic.version = 11 : i64} {
  func.func @fused_kernel(%arg0: memref<8x128xf32, #tpu.memory_space<vmem>>, %arg1: memref<32x8xf32, #tpu.memory_space<vmem>>, %arg2: memref<32x1xf32, #tpu.memory_space<vmem>>, %arg3: memref<32x32xf32, #tpu.memory_space<vmem>>, %arg4: memref<32x1xf32, #tpu.memory_space<vmem>>, %arg5: memref<1x32xf32, #tpu.memory_space<vmem>>, %arg6: memref<1x1xf32, #tpu.memory_space<vmem>>, %arg7: memref<2x16x16xf32, #tpu.memory_space<vmem>>, %arg8: memref<16x16xf32, #tpu.memory_space<vmem>>, %arg9: memref<16x16xf32, #tpu.memory_space<vmem>>, %arg10: memref<1x128xf32, #tpu.memory_space<vmem>>, %arg11: memref<2x16x16xf32, #tpu.memory_space<vmem>>) attributes {dimension_semantics = [], scalar_prefetch = 0 : i64, scratch_operands = 0 : i64, tpu.core_type = #tpu.core_type<tc>} {
    %c0 = arith.constant 0 : index
    %c0_0 = arith.constant 0 : index
    %0 = vector.load %arg1[%c0, %c0_0] : memref<32x8xf32, #tpu.memory_space<vmem>>, vector<32x8xf32>
    %c0_1 = arith.constant 0 : index
    %c0_2 = arith.constant 0 : index
    %1 = vector.load %arg0[%c0_1, %c0_2] : memref<8x128xf32, #tpu.memory_space<vmem>>, vector<8x128xf32>
    %cst = arith.constant dense<0.000000e+00> : vector<32x128xf32>
    %2 = tpu.matmul %0, %1, %cst {dimension_numbers = #tpu.dot_dimension_numbers<[1], [0], [0], [1], [0, 0, 1, 1], [], []>} : vector<32x8xf32>, vector<8x128xf32>, vector<32x128xf32> -> vector<32x128xf32>
    %c0_3 = arith.constant 0 : index
    %c0_4 = arith.constant 0 : index
    %3 = vector.load %arg2[%c0_3, %c0_4] : memref<32x1xf32, #tpu.memory_space<vmem>>, vector<32x1xf32>
    %4 = vector.broadcast %3 : vector<32x1xf32> to vector<32x128xf32>
    %5 = arith.addf %2, %4 : vector<32x128xf32>
    %cst_5 = arith.constant 0.000000e+00 : f32
    %6 = vector.broadcast %cst_5 : f32 to vector<32x128xf32>
    %7 = arith.maximumf %5, %6 : vector<32x128xf32>
    %c0_6 = arith.constant 0 : index
    %c0_7 = arith.constant 0 : index
    %8 = vector.load %arg3[%c0_6, %c0_7] : memref<32x32xf32, #tpu.memory_space<vmem>>, vector<32x32xf32>
    %cst_8 = arith.constant dense<0.000000e+00> : vector<32x128xf32>
    %9 = tpu.matmul %8, %7, %cst_8 {dimension_numbers = #tpu.dot_dimension_numbers<[1], [0], [0], [1], [0, 0, 1, 1], [], []>} : vector<32x32xf32>, vector<32x128xf32>, vector<32x128xf32> -> vector<32x128xf32>
    %c0_9 = arith.constant 0 : index
    %c0_10 = arith.constant 0 : index
    %10 = vector.load %arg4[%c0_9, %c0_10] : memref<32x1xf32, #tpu.memory_space<vmem>>, vector<32x1xf32>
    %11 = vector.broadcast %10 : vector<32x1xf32> to vector<32x128xf32>
    %12 = arith.addf %9, %11 : vector<32x128xf32>
    %cst_11 = arith.constant 0.000000e+00 : f32
    %13 = vector.broadcast %cst_11 : f32 to vector<32x128xf32>
    %14 = arith.maximumf %12, %13 : vector<32x128xf32>
    %c0_12 = arith.constant 0 : index
    %c0_13 = arith.constant 0 : index
    %15 = vector.load %arg5[%c0_12, %c0_13] : memref<1x32xf32, #tpu.memory_space<vmem>>, vector<1x32xf32>
    %cst_14 = arith.constant dense<0.000000e+00> : vector<1x128xf32>
    %16 = tpu.matmul %15, %14, %cst_14 {dimension_numbers = #tpu.dot_dimension_numbers<[1], [0], [0], [1], [0, 0, 1, 1], [], []>} : vector<1x32xf32>, vector<32x128xf32>, vector<1x128xf32> -> vector<1x128xf32>
    %c0_15 = arith.constant 0 : index
    %c0_16 = arith.constant 0 : index
    %17 = vector.load %arg6[%c0_15, %c0_16] : memref<1x1xf32, #tpu.memory_space<vmem>>, vector<1x1xf32>
    %18 = vector.broadcast %17 : vector<1x1xf32> to vector<1x128xf32>
    %19 = arith.addf %16, %18 : vector<1x128xf32>
    %c0_17 = arith.constant 0 : index
    %c0_18 = arith.constant 0 : index
    %20 = vector.load %arg10[%c0_17, %c0_18] : memref<1x128xf32, #tpu.memory_space<vmem>>, vector<1x128xf32>
    tpu.vector_store %arg10[%c0_17, %c0_18], %19 {strides = array<i32>} : memref<1x128xf32, #tpu.memory_space<vmem>>, vector<1x128xf32>,
    %c0_19 = arith.constant 0 : index
    %c0_20 = arith.constant 0 : index
    %21 = vector.load %arg8[%c0_19, %c0_20] : memref<16x16xf32, #tpu.memory_space<vmem>>, vector<16x16xf32>
    %c0_21 = arith.constant 0 : index
    %c0_22 = arith.constant 0 : index
    %c0_23 = arith.constant 0 : index
    %22 = vector.load %arg7[%c0_21, %c0_22, %c0_23] : memref<2x16x16xf32, #tpu.memory_space<vmem>>, vector<1x16x16xf32>
    %23 = vector.shape_cast %22 : vector<1x16x16xf32> to vector<16x16xf32>
    %cst_24 = arith.constant dense<0.000000e+00> : vector<16x16xf32>
    %24 = tpu.matmul %21, %23, %cst_24 {dimension_numbers = #tpu.dot_dimension_numbers<[1], [0], [0], [1], [0, 0, 1, 1], [], []>} : vector<16x16xf32>, vector<16x16xf32>, vector<16x16xf32> -> vector<16x16xf32>
    %c0_25 = arith.constant 0 : index
    %c0_26 = arith.constant 0 : index
    %25 = vector.load %arg9[%c0_25, %c0_26] : memref<16x16xf32, #tpu.memory_space<vmem>>, vector<16x16xf32>
    %cst_27 = arith.constant dense<0.000000e+00> : vector<16x16xf32>
    %26 = tpu.matmul %24, %25, %cst_27 {dimension_numbers = #tpu.dot_dimension_numbers<[1], [0], [0], [1], [0, 0, 1, 1], [], []>} : vector<16x16xf32>, vector<16x16xf32>, vector<16x16xf32> -> vector<16x16xf32>
    %c0_28 = arith.constant 0 : index
    %c0_29 = arith.constant 0 : index
    %c0_30 = arith.constant 0 : index
    %27 = vector.load %arg11[%c0_28, %c0_29, %c0_30] : memref<2x16x16xf32, #tpu.memory_space<vmem>>, vector<1x16x16xf32>
    %28 = vector.shape_cast %27 : vector<1x16x16xf32> to vector<16x16xf32>
    %29 = vector.shape_cast %26 : vector<16x16xf32> to vector<1x16x16xf32>
    tpu.vector_store %arg11[%c0_28, %c0_29, %c0_30], %29 {strides = array<i32>} : memref<2x16x16xf32, #tpu.memory_space<vmem>>, vector<1x16x16xf32>,
    %c0_31 = arith.constant 0 : index
    %c0_32 = arith.constant 0 : index
    %30 = vector.load %arg8[%c0_31, %c0_32] : memref<16x16xf32, #tpu.memory_space<vmem>>, vector<16x16xf32>
    %c1 = arith.constant 1 : index
    %c0_33 = arith.constant 0 : index
    %c0_34 = arith.constant 0 : index
    %31 = vector.load %arg7[%c1, %c0_33, %c0_34] : memref<2x16x16xf32, #tpu.memory_space<vmem>>, vector<1x16x16xf32>
    %32 = vector.shape_cast %31 : vector<1x16x16xf32> to vector<16x16xf32>
    %cst_35 = arith.constant dense<0.000000e+00> : vector<16x16xf32>
    %33 = tpu.matmul %30, %32, %cst_35 {dimension_numbers = #tpu.dot_dimension_numbers<[1], [0], [0], [1], [0, 0, 1, 1], [], []>} : vector<16x16xf32>, vector<16x16xf32>, vector<16x16xf32> -> vector<16x16xf32>
    %c0_36 = arith.constant 0 : index
    %c0_37 = arith.constant 0 : index
    %34 = vector.load %arg9[%c0_36, %c0_37] : memref<16x16xf32, #tpu.memory_space<vmem>>, vector<16x16xf32>
    %cst_38 = arith.constant dense<0.000000e+00> : vector<16x16xf32>
    %35 = tpu.matmul %33, %34, %cst_38 {dimension_numbers = #tpu.dot_dimension_numbers<[1], [0], [0], [1], [0, 0, 1, 1], [], []>} : vector<16x16xf32>, vector<16x16xf32>, vector<16x16xf32> -> vector<16x16xf32>
    %c1_39 = arith.constant 1 : index
    %c0_40 = arith.constant 0 : index
    %c0_41 = arith.constant 0 : index
    %36 = vector.load %arg11[%c1_39, %c0_40, %c0_41] : memref<2x16x16xf32, #tpu.memory_space<vmem>>, vector<1x16x16xf32>
    %37 = vector.shape_cast %36 : vector<1x16x16xf32> to vector<16x16xf32>
    %38 = vector.shape_cast %35 : vector<16x16xf32> to vector<1x16x16xf32>
    tpu.vector_store %arg11[%c1_39, %c0_40, %c0_41], %38 {strides = array<i32>} : memref<2x16x16xf32, #tpu.memory_space<vmem>>, vector<1x16x16xf32>,
    return
  }
}

</mosaic_0001>

<llo_original>
// kernel: inr_encoder_forward.1
$region0: #{inr_encoder_forward.1}
  #allocation0 [shape = 'u32[]', space=smem, size = 0x4, offset = 0x4, fixed_abs, tag = 'smem constant byte address 0x4 - core index']
  #allocation1 [shape = 'u32[144,128]{1,0:T(1,128)}', space=vmem, size = 0x12000, scoped, tag = 'internal scratch']
  #allocation2 [shape = 'f32[1,1]{1,0:T(1,128)S(1)}', space=vmem, size = 0x200, scoped, tag = 'scoped memory for inr_encoder_forward.1']
  %s0 = inlined_call_operand.vmem [shape: f32[8,128], index: 0, kind: input, shape index: {}]
  %s1 = inlined_call_operand.vmem [shape: f32[32,8], index: 1, kind: input, shape index: {}]
  %s2 = inlined_call_operand.vmem [shape: f32[32,1], index: 2, kind: input, shape index: {}]
  %s3 = inlined_call_operand.vmem [shape: f32[32,32], index: 3, kind: input, shape index: {}]
  %s4 = inlined_call_operand.vmem [shape: f32[32,1], index: 4, kind: input, shape index: {}]
  %s5 = inlined_call_operand.vmem [shape: f32[1,32], index: 5, kind: input, shape index: {}]
  %s6 = inlined_call_operand.<no memory space> [shape: f32[1,1], index: 6, kind: input, shape index: {}]
  %s7 = inlined_call_operand.vmem [shape: f32[2,16,16], index: 7, kind: input, shape index: {}]
  %s8 = inlined_call_operand.vmem [shape: f32[16,16], index: 8, kind: input, shape index: {}]
  %s9 = inlined_call_operand.vmem [shape: f32[16,16], index: 9, kind: input, shape index: {}]
  %s10 = inlined_call_operand.vmem [shape: f32[1,128], index: 10, kind: output, shape index: {0}]
  %s11 = inlined_call_operand.vmem [shape: f32[2,16,16], index: 11, kind: output, shape index: {1}]
  %12 = xla_tuple %s10, %s11
  %s13 = sld [smem:[#allocation0]]
  $region58: #{inr_encoder_forward.1} parent=0
    _
  %s15 = ssub.s32 1, %s13
  %s16 = scalar_select 0, %s15, %s13
  %v17 = vstv %s6
  %18 = vst [vmem:[#allocation2] sm:$0x1] %v17
  // Predicated region
  $region2: #{inr_encoder_forward.1} parent=0 // pred_check
    _
  $region3: #{inr_encoder_forward.1} parent=0 // pred_check_branch
    %20 = sbr.rel (0) target = $region5
  $region4: #{inr_encoder_forward.1} parent=0 // pred_region
    _
  $region5: #{inr_encoder_forward.1} parent=0 // pred_fallthru
    _
  // Predicated region
  $region6: #{inr_encoder_forward.1} parent=0 // pred_check
    _
  $region7: #{inr_encoder_forward.1} parent=0 // pred_check_branch
    %22 = sbr.rel (0) target = $region9
  $region8: #{inr_encoder_forward.1} parent=0 // pred_region
    _
  $region9: #{inr_encoder_forward.1} parent=0 // pred_fallthru
    _
  // Predicated region
  $region10: #{inr_encoder_forward.1} parent=0 // pred_check
    _
  $region11: #{inr_encoder_forward.1} parent=0 // pred_check_branch
    %24 = sbr.rel (0) target = $region13
  $region12: #{inr_encoder_forward.1} parent=0 // pred_region
    _
  $region13: #{inr_encoder_forward.1} parent=0 // pred_fallthru
    _
  // Predicated region
  $region14: #{inr_encoder_forward.1} parent=0 // pred_check
    _
  $region15: #{inr_encoder_forward.1} parent=0 // pred_check_branch
    %26 = sbr.rel (0) target = $region17
  $region16: #{inr_encoder_forward.1} parent=0 // pred_region
    _
  $region17: #{inr_encoder_forward.1} parent=0 // pred_fallthru
    _
  // Predicated region
  $region18: #{inr_encoder_forward.1} parent=0 // pred_check
    _
  $region19: #{inr_encoder_forward.1} parent=0 // pred_check_branch
    %28 = sbr.rel (0) target = $region21
  $region20: #{inr_encoder_forward.1} parent=0 // pred_region
    _
  $region21: #{inr_encoder_forward.1} parent=0 // pred_fallthru
    _
  // Predicated region
  $region22: #{inr_encoder_forward.1} parent=0 // pred_check
    _
  $region23: #{inr_encoder_forward.1} parent=0 // pred_check_branch
    %30 = sbr.rel (0) target = $region25
  $region24: #{inr_encoder_forward.1} parent=0 // pred_region
    _
  $region25: #{inr_encoder_forward.1} parent=0 // pred_fallthru
    _
  // Predicated region
  $region26: #{inr_encoder_forward.1} parent=0 // pred_check
    _
  $region27: #{inr_encoder_forward.1} parent=0 // pred_check_branch
    %32 = sbr.rel (0) target = $region29
  $region28: #{inr_encoder_forward.1} parent=0 // pred_region
    _
  $region29: #{inr_encoder_forward.1} parent=0 // pred_fallthru
    _
  // Predicated region
  $region30: #{inr_encoder_forward.1} parent=0 // pred_check
    _
  $region31: #{inr_encoder_forward.1} parent=0 // pred_check_branch
    %34 = sbr.rel (0) target = $region33
  $region32: #{inr_encoder_forward.1} parent=0 // pred_region
    _
  $region33: #{inr_encoder_forward.1} parent=0 // pred_fallthru
    _
  // Predicated region
  $region34: #{inr_encoder_forward.1} parent=0 // pred_check
    _
  $region35: #{inr_encoder_forward.1} parent=0 // pred_check_branch
    %36 = sbr.rel (0) target = $region37
  $region36: #{inr_encoder_forward.1} parent=0 // pred_region
    _
  $region37: #{inr_encoder_forward.1} parent=0 // pred_fallthru
    _
  // Predicated region
  $region38: #{inr_encoder_forward.1} parent=0 // pred_check
    _
  $region39: #{inr_encoder_forward.1} parent=0 // pred_check_branch
    %38 = sbr.rel (0) target = $region41
  $region40: #{inr_encoder_forward.1} parent=0 // pred_region
    _
  $region41: #{inr_encoder_forward.1} parent=0 // pred_fallthru
    _
  %v39 = vld [vmem:[%s1] sm:$0xff]
  %v40 = vld [vmem:[%s1 + $0x8] sm:$0xff]
  %v41 = vld [vmem:[%s1 + $0x10] sm:$0xff]
  %v42 = vld [vmem:[%s1 + $0x18] sm:$0xff]
  %v43 = vld [vmem:[%s0] sm:$0xff]
  %v44 = vld [vmem:[%s2] sm:$0xff]
  %v45 = vld [vmem:[%s2 + $0x8] sm:$0xff]
  %v46 = vld [vmem:[%s2 + $0x10] sm:$0xff]
  %v47 = vld [vmem:[%s2 + $0x18] sm:$0xff]
  %49 = vset.pattern.permute.xlu0 0
  %50 = vperm.xlu0 %49, %v44
  %v51 = vpop.permute.xlu0 %50
  %54 = vset.pattern.permute.xlu0 0
  %55 = vperm.xlu0 %54, %v45
  %v56 = vpop.permute.xlu0 %55
  %59 = vset.pattern.permute.xlu0 0
  %60 = vperm.xlu0 %59, %v46
  %v61 = vpop.permute.xlu0 %60
  %64 = vset.pattern.permute.xlu0 0
  %65 = vperm.xlu0 %64, %v47
  %v66 = vpop.permute.xlu0 %65
  %vm68 = vcmask 64512
  %v70 = vsel %vm68, %v39, 0
  %v73 = vsel %vm68, %v40, 0
  %v76 = vsel %vm68, %v41, 0
  %v79 = vsel %vm68, %v42, 0
  %81 = vmatprep.subr.mxu0 0.0
  %82 = vmatpush1.msra.mxu0 %v43
  %83 = vmatprep.subr.mxu0 0.0
  %84 = vmatpush1.msra.mxu0 0.0
  %85 = vmatprep.subr.mxu0 0.0
  %86 = vmatpush1.msra.mxu0 0.0
  %87 = vmatprep.subr.mxu0 0.0
  %88 = vmatpush1.msra.mxu0 0.0
  %89 = vmatprep.subr.mxu0 0.0
  %90 = vmatpush1.msra.mxu0 0.0
  %91 = vmatprep.subr.mxu0 0.0
  %92 = vmatpush1.msra.mxu0 0.0
  %93 = vmatprep.subr.mxu0 0.0
  %94 = vmatpush1.msra.mxu0 0.0
  %95 = vmatprep.subr.mxu0 0.0
  %96 = vmatpush1.msra.mxu0 0.0
  %97 = vmatprep.subr.mxu0 0.0
  %98 = vmatpush1.msra.mxu0 0.0
  %99 = vmatprep.subr.mxu0 0.0
  %100 = vmatpush1.msra.mxu0 0.0
  %101 = vmatprep.subr.mxu0 0.0
  %102 = vmatpush1.msra.mxu0 0.0
  %103 = vmatprep.subr.mxu0 0.0
  %104 = vmatpush1.msra.mxu0 0.0
  %105 = vmatprep.subr.mxu0 0.0
  %106 = vmatpush1.msra.mxu0 0.0
  %107 = vmatprep.subr.mxu0 0.0
  %108 = vmatpush1.msra.mxu0 0.0
  %109 = vmatprep.subr.mxu0 0.0
  %110 = vmatpush1.msra.mxu0 0.0
  %111 = vmatprep.subr.mxu0 0.0
  %112 = vmatpush1.msra.mxu0 0.0
  %113 = vmatprep.subr.mxu0 0.0
  %114 = vmatpush1.msra.mxu0 0.0
  %115 = vmatprep.subr.mxu0 0.0
  %116 = vmatpush1.msra.mxu0 0.0
  %117 = vmatprep.subr.mxu0 0.0
  %118 = vmatpush1.msra.mxu0 0.0
  %119 = vmatprep.subr.mxu0 0.0
  %120 = vmatpush1.msra.mxu0 0.0
  %121 = vmatprep.subr.mxu0 0.0
  %122 = vmatpush1.msra.mxu0 0.0
  %123 = vmatprep.subr.mxu0 0.0
  %124 = vmatpush1.msra.mxu0 0.0
  %125 = vmatprep.subr.mxu0 0.0
  %126 = vmatpush1.msra.mxu0 0.0
  %127 = vmatprep.subr.mxu0 0.0
  %128 = vmatpush1.msra.mxu0 0.0
  %129 = vmatprep.subr.mxu0 0.0
  %130 = vmatpush1.msra.mxu0 0.0
  %131 = vmatprep.subr.mxu0 0.0
  %132 = vmatpush1.msra.mxu0 0.0
  %133 = vmatprep.subr.mxu0 0.0
  %134 = vmatpush1.msra.mxu0 0.0
  %135 = vmatprep.subr.mxu0 0.0
  %136 = vmatpush1.msra.mxu0 0.0
  %137 = vmatprep.subr.mxu0 0.0
  %138 = vmatpush1.msra.mxu0 0.0
  %139 = vmatprep.subr.mxu0 0.0
  %140 = vmatpush1.msra.mxu0 0.0
  %141 = vmatprep.subr.mxu0 0.0
  %142 = vmatpush1.msra.mxu0 0.0
  %143 = vmatprep.subr.mxu0 0.0
  %144 = vmatpush1.msra.mxu0 0.0
  %145 = vmatprep.mubr.f32.mxu0 0.0
  %146 = vmatmul.mubr.f32.gmra.mrb[0].mxu0 %v70
  %v147 = vpop.f32.mrb[0].mxu0
  %v148 = vadd.f32 %v51, %v147
  %v149 = vpop.f32.mrb[0].mxu0
  %150 = vmatprep.mubr.f32.mxu0 0.0
  %151 = vmatmul.mubr.f32.gmra.mrb[0].mxu0 %v73
  %v152 = vpop.f32.mrb[0].mxu0
  %v153 = vadd.f32 %v56, %v152
  %v154 = vpop.f32.mrb[0].mxu0
  %155 = vmatprep.mubr.f32.mxu0 0.0
  %156 = vmatmul.mubr.f32.gmra.mrb[0].mxu0 %v76
  %v157 = vpop.f32.mrb[0].mxu0
  %v158 = vadd.f32 %v61, %v157
  %v159 = vpop.f32.mrb[0].mxu0
  %160 = vmatprep.mubr.f32.mxu0 0.0
  %161 = vmatmul.mubr.f32.gmra.mrb[0].mxu0 %v79
  %v162 = vpop.f32.mrb[0].mxu0
  %v163 = vadd.f32 %v66, %v162
  %v164 = vpop.f32.mrb[0].mxu0
  %165 = vdwg.mxu0
  %v166 = vmax.f32 %v148, 0.0
  %v167 = vmax.f32 %v153, 0.0
  %v168 = vmax.f32 %v158, 0.0
  %v169 = vmax.f32 %v163, 0.0
  %v170 = vld [vmem:[%s3] sm:$0xff]
  %v171 = vld [vmem:[%s3 + $0x8] sm:$0xff]
  %v172 = vld [vmem:[%s3 + $0x10] sm:$0xff]
  %v173 = vld [vmem:[%s3 + $0x18] sm:$0xff]
  %v174 = vld [vmem:[%s4] sm:$0xff]
  %v175 = vld [vmem:[%s4 + $0x8] sm:$0xff]
  %v176 = vld [vmem:[%s4 + $0x10] sm:$0xff]
  %v177 = vld [vmem:[%s4 + $0x18] sm:$0xff]
  %179 = vset.pattern.permute.xlu0 0
  %180 = vperm.xlu0 %179, %v174
  %v181 = vpop.permute.xlu0 %180
  %184 = vset.pattern.permute.xlu0 0
  %185 = vperm.xlu0 %184, %v175
  %v186 = vpop.permute.xlu0 %185
  %189 = vset.pattern.permute.xlu0 0
  %190 = vperm.xlu0 %189, %v176
  %v191 = vpop.permute.xlu0 %190
  %194 = vset.pattern.permute.xlu0 0
  %195 = vperm.xlu0 %194, %v177
  %v196 = vpop.permute.xlu0 %195
  %vm198 = vcmask 261120
  %v200 = vsel %vm198, %v170, 0
  %v203 = vsel %vm198, %v171, 0
  %v206 = vsel %vm198, %v172, 0
  %v209 = vsel %vm198, %v173, 0
  %211 = vmatprep.subr.mxu0 0.0
  %212 = vmatpush1.msra.mxu0 %v166
  %213 = vmatprep.subr.mxu0 0.0
  %214 = vmatpush1.msra.mxu0 %v167
  %215 = vmatprep.subr.mxu0 0.0
  %216 = vmatpush1.msra.mxu0 %v168
  %217 = vmatprep.subr.mxu0 0.0
  %218 = vmatpush1.msra.mxu0 %v169
  %219 = vmatprep.subr.mxu0 0.0
  %220 = vmatpush1.msra.mxu0 0.0
  %221 = vmatprep.subr.mxu0 0.0
  %222 = vmatpush1.msra.mxu0 0.0
  %223 = vmatprep.subr.mxu0 0.0
  %224 = vmatpush1.msra.mxu0 0.0
  %225 = vmatprep.subr.mxu0 0.0
  %226 = vmatpush1.msra.mxu0 0.0
  %227 = vmatprep.subr.mxu0 0.0
  %228 = vmatpush1.msra.mxu0 0.0
  %229 = vmatprep.subr.mxu0 0.0
  %230 = vmatpush1.msra.mxu0 0.0
  %231 = vmatprep.subr.mxu0 0.0
  %232 = vmatpush1.msra.mxu0 0.0
  %233 = vmatprep.subr.mxu0 0.0
  %234 = vmatpush1.msra.mxu0 0.0
  %235 = vmatprep.subr.mxu0 0.0
  %236 = vmatpush1.msra.mxu0 0.0
  %237 = vmatprep.subr.mxu0 0.0
  %238 = vmatpush1.msra.mxu0 0.0
  %239 = vmatprep.subr.mxu0 0.0
  %240 = vmatpush1.msra.mxu0 0.0
  %241 = vmatprep.subr.mxu0 0.0
  %242 = vmatpush1.msra.mxu0 0.0
  %243 = vmatprep.subr.mxu0 0.0
  %244 = vmatpush1.msra.mxu0 0.0
  %245 = vmatprep.subr.mxu0 0.0
  %246 = vmatpush1.msra.mxu0 0.0
  %247 = vmatprep.subr.mxu0 0.0
  %248 = vmatpush1.msra.mxu0 0.0
  %249 = vmatprep.subr.mxu0 0.0
  %250 = vmatpush1.msra.mxu0 0.0
  %251 = vmatprep.subr.mxu0 0.0
  %252 = vmatpush1.msra.mxu0 0.0
  %253 = vmatprep.subr.mxu0 0.0
  %254 = vmatpush1.msra.mxu0 0.0
  %255 = vmatprep.subr.mxu0 0.0
  %256 = vmatpush1.msra.mxu0 0.0
  %257 = vmatprep.subr.mxu0 0.0
  %258 = vmatpush1.msra.mxu0 0.0
  %259 = vmatprep.subr.mxu0 0.0
  %260 = vmatpush1.msra.mxu0 0.0
  %261 = vmatprep.subr.mxu0 0.0
  %262 = vmatpush1.msra.mxu0 0.0
  %263 = vmatprep.subr.mxu0 0.0
  %264 = vmatpush1.msra.mxu0 0.0
  %265 = vmatprep.subr.mxu0 0.0
  %266 = vmatpush1.msra.mxu0 0.0
  %267 = vmatprep.subr.mxu0 0.0
  %268 = vmatpush1.msra.mxu0 0.0
  %269 = vmatprep.subr.mxu0 0.0
  %270 = vmatpush1.msra.mxu0 0.0
  %271 = vmatprep.subr.mxu0 0.0
  %272 = vmatpush1.msra.mxu0 0.0
  %273 = vmatprep.subr.mxu0 0.0
  %274 = vmatpush1.msra.mxu0 0.0
  %275 = vmatprep.mubr.f32.mxu0 0.0
  %276 = vmatmul.mubr.f32.gmra.mrb[0].mxu0 %v200
  %v277 = vpop.f32.mrb[0].mxu0
  %v278 = vadd.f32 %v181, %v277
  %v279 = vpop.f32.mrb[0].mxu0
  %280 = vmatprep.mubr.f32.mxu0 0.0
  %281 = vmatmul.mubr.f32.gmra.mrb[0].mxu0 %v203
  %v282 = vpop.f32.mrb[0].mxu0
  %v283 = vadd.f32 %v186, %v282
  %v284 = vpop.f32.mrb[0].mxu0
  %285 = vmatprep.mubr.f32.mxu0 0.0
  %286 = vmatmul.mubr.f32.gmra.mrb[0].mxu0 %v206
  %v287 = vpop.f32.mrb[0].mxu0
  %v288 = vadd.f32 %v191, %v287
  %v289 = vpop.f32.mrb[0].mxu0
  %290 = vmatprep.mubr.f32.mxu0 0.0
  %291 = vmatmul.mubr.f32.gmra.mrb[0].mxu0 %v209
  %v292 = vpop.f32.mrb[0].mxu0
  %v293 = vadd.f32 %v196, %v292
  %v294 = vpop.f32.mrb[0].mxu0
  %295 = vdwg.mxu0
  %v296 = vmax.f32 %v278, 0.0
  %v297 = vmax.f32 %v283, 0.0
  %v298 = vmax.f32 %v288, 0.0
  %v299 = vmax.f32 %v293, 0.0
  %v300 = vld [vmem:[%s5] sm:$0x1]
  %v301 = vld [vmem:[#allocation2] sm:$0x1]
  %303 = vset.pattern.permute.xlu0 0
  %304 = vperm.xlu0 %303, %v301
  %v305 = vpop.permute.xlu0 %304
  %v307 = vlaneseq
  %v308 = vshrl.u32 %v307, 7
  %v309 = vsub.s32 0, %v308
  %v310 = vrot.slane %v305, %v309
  %v312 = vsel %vm198, %v300, 0
  %314 = vmatprep.subr.mxu0 0.0
  %315 = vmatpush1.msra.mxu0 %v296
  %316 = vmatprep.subr.mxu0 0.0
  %317 = vmatpush1.msra.mxu0 %v297
  %318 = vmatprep.subr.mxu0 0.0
  %319 = vmatpush1.msra.mxu0 %v298
  %320 = vmatprep.subr.mxu0 0.0
  %321 = vmatpush1.msra.mxu0 %v299
  %322 = vmatprep.subr.mxu0 0.0
  %323 = vmatpush1.msra.mxu0 0.0
  %324 = vmatprep.subr.mxu0 0.0
  %325 = vmatpush1.msra.mxu0 0.0
  %326 = vmatprep.subr.mxu0 0.0
  %327 = vmatpush1.msra.mxu0 0.0
  %328 = vmatprep.subr.mxu0 0.0
  %329 = vmatpush1.msra.mxu0 0.0
  %330 = vmatprep.subr.mxu0 0.0
  %331 = vmatpush1.msra.mxu0 0.0
  %332 = vmatprep.subr.mxu0 0.0
  %333 = vmatpush1.msra.mxu0 0.0
  %334 = vmatprep.subr.mxu0 0.0
  %335 = vmatpush1.msra.mxu0 0.0
  %336 = vmatprep.subr.mxu0 0.0
  %337 = vmatpush1.msra.mxu0 0.0
  %338 = vmatprep.subr.mxu0 0.0
  %339 = vmatpush1.msra.mxu0 0.0
  %340 = vmatprep.subr.mxu0 0.0
  %341 = vmatpush1.msra.mxu0 0.0
  %342 = vmatprep.subr.mxu0 0.0
  %343 = vmatpush1.msra.mxu0 0.0
  %344 = vmatprep.subr.mxu0 0.0
  %345 = vmatpush1.msra.mxu0 0.0
  %346 = vmatprep.subr.mxu0 0.0
  %347 = vmatpush1.msra.mxu0 0.0
  %348 = vmatprep.subr.mxu0 0.0
  %349 = vmatpush1.msra.mxu0 0.0
  %350 = vmatprep.subr.mxu0 0.0
  %351 = vmatpush1.msra.mxu0 0.0
  %352 = vmatprep.subr.mxu0 0.0
  %353 = vmatpush1.msra.mxu0 0.0
  %354 = vmatprep.subr.mxu0 0.0
  %355 = vmatpush1.msra.mxu0 0.0
  %356 = vmatprep.subr.mxu0 0.0
  %357 = vmatpush1.msra.mxu0 0.0
  %358 = vmatprep.subr.mxu0 0.0
  %359 = vmatpush1.msra.mxu0 0.0
  %360 = vmatprep.subr.mxu0 0.0
  %361 = vmatpush1.msra.mxu0 0.0
  %362 = vmatprep.subr.mxu0 0.0
  %363 = vmatpush1.msra.mxu0 0.0
  %364 = vmatprep.subr.mxu0 0.0
  %365 = vmatpush1.msra.mxu0 0.0
  %366 = vmatprep.subr.mxu0 0.0
  %367 = vmatpush1.msra.mxu0 0.0
  %368 = vmatprep.subr.mxu0 0.0
  %369 = vmatpush1.msra.mxu0 0.0
  %370 = vmatprep.subr.mxu0 0.0
  %371 = vmatpush1.msra.mxu0 0.0
  %372 = vmatprep.subr.mxu0 0.0
  %373 = vmatpush1.msra.mxu0 0.0
  %374 = vmatprep.subr.mxu0 0.0
  %375 = vmatpush1.msra.mxu0 0.0
  %376 = vmatprep.subr.mxu0 0.0
  %377 = vmatpush1.msra.mxu0 0.0
  %378 = vmatprep.mubr.f32.mxu0 0.0
  %379 = vmatmul.mubr.f32.gmra.mrb[0].mxu0 %v312
  %v380 = vpop.f32.mrb[0].mxu0
  %v381 = vadd.f32 %v310, %v380
  %v382 = vpop.f32.mrb[0].mxu0
  %383 = vdwg.mxu0
  %384 = vst [vmem:[%s10] sm:$0x1] %v381
  %v385 = vld [vmem:[%s8] sm:$0xff]
  %v386 = vld [vmem:[%s8 + $0x8] sm:$0xff]
  %v387 = vld [vmem:[%s7] sm:$0xff]
  %v388 = vld [vmem:[%s7 + $0x8] sm:$0xff]
  %vm389 = vcmask 130048
  %v391 = vsel %vm389, %v385, 0
  %v394 = vsel %vm389, %v386, 0
  %396 = vmatprep.subr.mxu0 0.0
  %397 = vmatpush1.msra.mxu0 %v387
  %398 = vmatprep.subr.mxu0 0.0
  %399 = vmatpush1.msra.mxu0 %v388
  %400 = vmatprep.subr.mxu0 0.0
  %401 = vmatpush1.msra.mxu0 0.0
  %402 = vmatprep.subr.mxu0 0.0
  %403 = vmatpush1.msra.mxu0 0.0
  %404 = vmatprep.subr.mxu0 0.0
  %405 = vmatpush1.msra.mxu0 0.0
  %406 = vmatprep.subr.mxu0 0.0
  %407 = vmatpush1.msra.mxu0 0.0
  %408 = vmatprep.subr.mxu0 0.0
  %409 = vmatpush1.msra.mxu0 0.0
  %410 = vmatprep.subr.mxu0 0.0
  %411 = vmatpush1.msra.mxu0 0.0
  %412 = vmatprep.subr.mxu0 0.0
  %413 = vmatpush1.msra.mxu0 0.0
  %414 = vmatprep.subr.mxu0 0.0
  %415 = vmatpush1.msra.mxu0 0.0
  %416 = vmatprep.subr.mxu0 0.0
  %417 = vmatpush1.msra.mxu0 0.0
  %418 = vmatprep.subr.mxu0 0.0
  %419 = vmatpush1.msra.mxu0 0.0
  %420 = vmatprep.subr.mxu0 0.0
  %421 = vmatpush1.msra.mxu0 0.0
  %422 = vmatprep.subr.mxu0 0.0
  %423 = vmatpush1.msra.mxu0 0.0
  %424 = vmatprep.subr.mxu0 0.0
  %425 = vmatpush1.msra.mxu0 0.0
  %426 = vmatprep.subr.mxu0 0.0
  %427 = vmatpush1.msra.mxu0 0.0
  %428 = vmatprep.subr.mxu0 0.0
  %429 = vmatpush1.msra.mxu0 0.0
  %430 = vmatprep.subr.mxu0 0.0
  %431 = vmatpush1.msra.mxu0 0.0
  %432 = vmatprep.subr.mxu0 0.0
  %433 = vmatpush1.msra.mxu0 0.0
  %434 = vmatprep.subr.mxu0 0.0
  %435 = vmatpush1.msra.mxu0 0.0
  %436 = vmatprep.subr.mxu0 0.0
  %437 = vmatpush1.msra.mxu0 0.0
  %438 = vmatprep.subr.mxu0 0.0
  %439 = vmatpush1.msra.mxu0 0.0
  %440 = vmatprep.subr.mxu0 0.0
  %441 = vmatpush1.msra.mxu0 0.0
  %442 = vmatprep.subr.mxu0 0.0
  %443 = vmatpush1.msra.mxu0 0.0
  %444 = vmatprep.subr.mxu0 0.0
  %445 = vmatpush1.msra.mxu0 0.0
  %446 = vmatprep.subr.mxu0 0.0
  %447 = vmatpush1.msra.mxu0 0.0
  %448 = vmatprep.subr.mxu0 0.0
  %449 = vmatpush1.msra.mxu0 0.0
  %450 = vmatprep.subr.mxu0 0.0
  %451 = vmatpush1.msra.mxu0 0.0
  %452 = vmatprep.subr.mxu0 0.0
  %453 = vmatpush1.msra.mxu0 0.0
  %454 = vmatprep.subr.mxu0 0.0
  %455 = vmatpush1.msra.mxu0 0.0
  %456 = vmatprep.subr.mxu0 0.0
  %457 = vmatpush1.msra.mxu0 0.0
  %458 = vmatprep.subr.mxu0 0.0
  %459 = vmatpush1.msra.mxu0 0.0
  %460 = vmatprep.mubr.f32.mxu0 0.0
  %461 = vmatmul.mubr.f32.gmra.mrb[0].mxu0 %v391
  %v462 = vpop.f32.mrb[0].mxu0
  %v463 = vadd.f32 0.0, %v462
  %v464 = vpop.f32.mrb[0].mxu0
  %465 = vmatprep.mubr.f32.mxu0 0.0
  %466 = vmatmul.mubr.f32.gmra.mrb[0].mxu0 %v394
  %v467 = vpop.f32.mrb[0].mxu0
  %v468 = vadd.f32 0.0, %v467
  %v469 = vpop.f32.mrb[0].mxu0
  %470 = vdwg.mxu0
  %v471 = vld [vmem:[%s9] sm:$0xff]
  %v472 = vld [vmem:[%s9 + $0x8] sm:$0xff]
  %v474 = vsel %vm389, %v463, 0
  %v477 = vsel %vm389, %v468, 0
  %479 = vmatprep.subr.mxu0 0.0
  %480 = vmatpush1.msra.mxu0 %v471
  %481 = vmatprep.subr.mxu0 0.0
  %482 = vmatpush1.msra.mxu0 %v472
  %483 = vmatprep.subr.mxu0 0.0
  %484 = vmatpush1.msra.mxu0 0.0
  %485 = vmatprep.subr.mxu0 0.0
  %486 = vmatpush1.msra.mxu0 0.0
  %487 = vmatprep.subr.mxu0 0.0
  %488 = vmatpush1.msra.mxu0 0.0
  %489 = vmatprep.subr.mxu0 0.0
  %490 = vmatpush1.msra.mxu0 0.0
  %491 = vmatprep.subr.mxu0 0.0
  %492 = vmatpush1.msra.mxu0 0.0
  %493 = vmatprep.subr.mxu0 0.0
  %494 = vmatpush1.msra.mxu0 0.0
  %495 = vmatprep.subr.mxu0 0.0
  %496 = vmatpush1.msra.mxu0 0.0
  %497 = vmatprep.subr.mxu0 0.0
  %498 = vmatpush1.msra.mxu0 0.0
  %499 = vmatprep.subr.mxu0 0.0
  %500 = vmatpush1.msra.mxu0 0.0
  %501 = vmatprep.subr.mxu0 0.0
  %502 = vmatpush1.msra.mxu0 0.0
  %503 = vmatprep.subr.mxu0 0.0
  %504 = vmatpush1.msra.mxu0 0.0
  %505 = vmatprep.subr.mxu0 0.0
  %506 = vmatpush1.msra.mxu0 0.0
  %507 = vmatprep.subr.mxu0 0.0
  %508 = vmatpush1.msra.mxu0 0.0
  %509 = vmatprep.subr.mxu0 0.0
  %510 = vmatpush1.msra.mxu0 0.0
  %511 = vmatprep.subr.mxu0 0.0
  %512 = vmatpush1.msra.mxu0 0.0
  %513 = vmatprep.subr.mxu0 0.0
  %514 = vmatpush1.msra.mxu0 0.0
  %515 = vmatprep.subr.mxu0 0.0
  %516 = vmatpush1.msra.mxu0 0.0
  %517 = vmatprep.subr.mxu0 0.0
  %518 = vmatpush1.msra.mxu0 0.0
  %519 = vmatprep.subr.mxu0 0.0
  %520 = vmatpush1.msra.mxu0 0.0
  %521 = vmatprep.subr.mxu0 0.0
  %522 = vmatpush1.msra.mxu0 0.0
  %523 = vmatprep.subr.mxu0 0.0
  %524 = vmatpush1.msra.mxu0 0.0
  %525 = vmatprep.subr.mxu0 0.0
  %526 = vmatpush1.msra.mxu0 0.0
  %527 = vmatprep.subr.mxu0 0.0
  %528 = vmatpush1.msra.mxu0 0.0
  %529 = vmatprep.subr.mxu0 0.0
  %530 = vmatpush1.msra.mxu0 0.0
  %531 = vmatprep.subr.mxu0 0.0
  %532 = vmatpush1.msra.mxu0 0.0
  %533 = vmatprep.subr.mxu0 0.0
  %534 = vmatpush1.msra.mxu0 0.0
  %535 = vmatprep.subr.mxu0 0.0
  %536 = vmatpush1.msra.mxu0 0.0
  %537 = vmatprep.subr.mxu0 0.0
  %538 = vmatpush1.msra.mxu0 0.0
  %539 = vmatprep.subr.mxu0 0.0
  %540 = vmatpush1.msra.mxu0 0.0
  %541 = vmatprep.subr.mxu0 0.0
  %542 = vmatpush1.msra.mxu0 0.0
  %543 = vmatprep.mubr.f32.mxu0 0.0
  %544 = vmatmul.mubr.f32.gmra.mrb[0].mxu0 %v474
  %v545 = vpop.f32.mrb[0].mxu0
  %v546 = vadd.f32 0.0, %v545
  %v547 = vpop.f32.mrb[0].mxu0
  %548 = vmatprep.mubr.f32.mxu0 0.0
  %549 = vmatmul.mubr.f32.gmra.mrb[0].mxu0 %v477
  %v550 = vpop.f32.mrb[0].mxu0
  %v551 = vadd.f32 0.0, %v550
  %v552 = vpop.f32.mrb[0].mxu0
  %553 = vdwg.mxu0
  %554 = vst.msk [vmem:[%s11] sm:$0xff] %vm389, %v546
  %555 = vst.msk [vmem:[%s11 + $0x8] sm:$0xff] %vm389, %v551
  %v556 = vld [vmem:[%s8] sm:$0xff]
  %v557 = vld [vmem:[%s8 + $0x8] sm:$0xff]
  %s558 = scalar_lea.vmem %s7, 16
  %v559 = vld [vmem:[%s558] sm:$0xff]
  %v560 = vld [vmem:[%s558 + $0x8] sm:$0xff]
  %v562 = vsel %vm389, %v556, 0
  %v565 = vsel %vm389, %v557, 0
  %567 = vmatprep.subr.mxu0 0.0
  %568 = vmatpush1.msra.mxu0 %v559
  %569 = vmatprep.subr.mxu0 0.0
  %570 = vmatpush1.msra.mxu0 %v560
  %571 = vmatprep.subr.mxu0 0.0
  %572 = vmatpush1.msra.mxu0 0.0
  %573 = vmatprep.subr.mxu0 0.0
  %574 = vmatpush1.msra.mxu0 0.0
  %575 = vmatprep.subr.mxu0 0.0
  %576 = vmatpush1.msra.mxu0 0.0
  %577 = vmatprep.subr.mxu0 0.0
  %578 = vmatpush1.msra.mxu0 0.0
  %579 = vmatprep.subr.mxu0 0.0
  %580 = vmatpush1.msra.mxu0 0.0
  %581 = vmatprep.subr.mxu0 0.0
  %582 = vmatpush1.msra.mxu0 0.0
  %583 = vmatprep.subr.mxu0 0.0
  %584 = vmatpush1.msra.mxu0 0.0
  %585 = vmatprep.subr.mxu0 0.0
  %586 = vmatpush1.msra.mxu0 0.0
  %587 = vmatprep.subr.mxu0 0.0
  %588 = vmatpush1.msra.mxu0 0.0
  %589 = vmatprep.subr.mxu0 0.0
  %590 = vmatpush1.msra.mxu0 0.0
  %591 = vmatprep.subr.mxu0 0.0
  %592 = vmatpush1.msra.mxu0 0.0
  %593 = vmatprep.subr.mxu0 0.0
  %594 = vmatpush1.msra.mxu0 0.0
  %595 = vmatprep.subr.mxu0 0.0
  %596 = vmatpush1.msra.mxu0 0.0
  %597 = vmatprep.subr.mxu0 0.0
  %598 = vmatpush1.msra.mxu0 0.0
  %599 = vmatprep.subr.mxu0 0.0
  %600 = vmatpush1.msra.mxu0 0.0
  %601 = vmatprep.subr.mxu0 0.0
  %602 = vmatpush1.msra.mxu0 0.0
  %603 = vmatprep.subr.mxu0 0.0
  %604 = vmatpush1.msra.mxu0 0.0
  %605 = vmatprep.subr.mxu0 0.0
  %606 = vmatpush1.msra.mxu0 0.0
  %607 = vmatprep.subr.mxu0 0.0
  %608 = vmatpush1.msra.mxu0 0.0
  %609 = vmatprep.subr.mxu0 0.0
  %610 = vmatpush1.msra.mxu0 0.0
  %611 = vmatprep.subr.mxu0 0.0
  %612 = vmatpush1.msra.mxu0 0.0
  %613 = vmatprep.subr.mxu0 0.0
  %614 = vmatpush1.msra.mxu0 0.0
  %615 = vmatprep.subr.mxu0 0.0
  %616 = vmatpush1.msra.mxu0 0.0
  %617 = vmatprep.subr.mxu0 0.0
  %618 = vmatpush1.msra.mxu0 0.0
  %619 = vmatprep.subr.mxu0 0.0
  %620 = vmatpush1.msra.mxu0 0.0
  %621 = vmatprep.subr.mxu0 0.0
  %622 = vmatpush1.msra.mxu0 0.0
  %623 = vmatprep.subr.mxu0 0.0
  %624 = vmatpush1.msra.mxu0 0.0
  %625 = vmatprep.subr.mxu0 0.0
  %626 = vmatpush1.msra.mxu0 0.0
  %627 = vmatprep.subr.mxu0 0.0
  %628 = vmatpush1.msra.mxu0 0.0
  %629 = vmatprep.subr.mxu0 0.0
  %630 = vmatpush1.msra.mxu0 0.0
  %631 = vmatprep.mubr.f32.mxu0 0.0
  %632 = vmatmul.mubr.f32.gmra.mrb[0].mxu0 %v562
  %v633 = vpop.f32.mrb[0].mxu0
  %v634 = vadd.f32 0.0, %v633
  %v635 = vpop.f32.mrb[0].mxu0
  %636 = vmatprep.mubr.f32.mxu0 0.0
  %637 = vmatmul.mubr.f32.gmra.mrb[0].mxu0 %v565
  %v638 = vpop.f32.mrb[0].mxu0
  %v639 = vadd.f32 0.0, %v638
  %v640 = vpop.f32.mrb[0].mxu0
  %641 = vdwg.mxu0
  %v642 = vld [vmem:[%s9] sm:$0xff]
  %v643 = vld [vmem:[%s9 + $0x8] sm:$0xff]
  %v645 = vsel %vm389, %v634, 0
  %v648 = vsel %vm389, %v639, 0
  %650 = vmatprep.subr.mxu0 0.0
  %651 = vmatpush1.msra.mxu0 %v642
  %652 = vmatprep.subr.mxu0 0.0
  %653 = vmatpush1.msra.mxu0 %v643
  %654 = vmatprep.subr.mxu0 0.0
  %655 = vmatpush1.msra.mxu0 0.0
  %656 = vmatprep.subr.mxu0 0.0
  %657 = vmatpush1.msra.mxu0 0.0
  %658 = vmatprep.subr.mxu0 0.0
  %659 = vmatpush1.msra.mxu0 0.0
  %660 = vmatprep.subr.mxu0 0.0
  %661 = vmatpush1.msra.mxu0 0.0
  %662 = vmatprep.subr.mxu0 0.0
  %663 = vmatpush1.msra.mxu0 0.0
  %664 = vmatprep.subr.mxu0 0.0
  %665 = vmatpush1.msra.mxu0 0.0
  %666 = vmatprep.subr.mxu0 0.0
  %667 = vmatpush1.msra.mxu0 0.0
  %668 = vmatprep.subr.mxu0 0.0
  %669 = vmatpush1.msra.mxu0 0.0
  %670 = vmatprep.subr.mxu0 0.0
  %671 = vmatpush1.msra.mxu0 0.0
  %672 = vmatprep.subr.mxu0 0.0
  %673 = vmatpush1.msra.mxu0 0.0
  %674 = vmatprep.subr.mxu0 0.0
  %675 = vmatpush1.msra.mxu0 0.0
  %676 = vmatprep.subr.mxu0 0.0
  %677 = vmatpush1.msra.mxu0 0.0
  %678 = vmatprep.subr.mxu0 0.0
  %679 = vmatpush1.msra.mxu0 0.0
  %680 = vmatprep.subr.mxu0 0.0
  %681 = vmatpush1.msra.mxu0 0.0
  %682 = vmatprep.subr.mxu0 0.0
  %683 = vmatpush1.msra.mxu0 0.0
  %684 = vmatprep.subr.mxu0 0.0
  %685 = vmatpush1.msra.mxu0 0.0
  %686 = vmatprep.subr.mxu0 0.0
  %687 = vmatpush1.msra.mxu0 0.0
  %688 = vmatprep.subr.mxu0 0.0
  %689 = vmatpush1.msra.mxu0 0.0
  %690 = vmatprep.subr.mxu0 0.0
  %691 = vmatpush1.msra.mxu0 0.0
  %692 = vmatprep.subr.mxu0 0.0
  %693 = vmatpush1.msra.mxu0 0.0
  %694 = vmatprep.subr.mxu0 0.0
  %695 = vmatpush1.msra.mxu0 0.0
  %696 = vmatprep.subr.mxu0 0.0
  %697 = vmatpush1.msra.mxu0 0.0
  %698 = vmatprep.subr.mxu0 0.0
  %699 = vmatpush1.msra.mxu0 0.0
  %700 = vmatprep.subr.mxu0 0.0
  %701 = vmatpush1.msra.mxu0 0.0
  %702 = vmatprep.subr.mxu0 0.0
  %703 = vmatpush1.msra.mxu0 0.0
  %704 = vmatprep.subr.mxu0 0.0
  %705 = vmatpush1.msra.mxu0 0.0
  %706 = vmatprep.subr.mxu0 0.0
  %707 = vmatpush1.msra.mxu0 0.0
  %708 = vmatprep.subr.mxu0 0.0
  %709 = vmatpush1.msra.mxu0 0.0
  %710 = vmatprep.subr.mxu0 0.0
  %711 = vmatpush1.msra.mxu0 0.0
  %712 = vmatprep.subr.mxu0 0.0
  %713 = vmatpush1.msra.mxu0 0.0
  %714 = vmatprep.mubr.f32.mxu0 0.0
  %715 = vmatmul.mubr.f32.gmra.mrb[0].mxu0 %v645
  %v716 = vpop.f32.mrb[0].mxu0
  %v717 = vadd.f32 0.0, %v716
  %v718 = vpop.f32.mrb[0].mxu0
  %719 = vmatprep.mubr.f32.mxu0 0.0
  %720 = vmatmul.mubr.f32.gmra.mrb[0].mxu0 %v648
  %v721 = vpop.f32.mrb[0].mxu0
  %v722 = vadd.f32 0.0, %v721
  %v723 = vpop.f32.mrb[0].mxu0
  %724 = vdwg.mxu0
  %s725 = scalar_lea.vmem %s11, 16
  %726 = vst.msk [vmem:[%s725] sm:$0xff] %vm389, %v717
  %727 = vst.msk [vmem:[%s725 + $0x8] sm:$0xff] %vm389, %v722
  // Predicated region
  $region42: #{inr_encoder_forward.1} parent=0 // pred_check
    _
  $region43: #{inr_encoder_forward.1} parent=0 // pred_check_branch
    %729 = sbr.rel (0) target = $region45
  $region44: #{inr_encoder_forward.1} parent=0 // pred_region
    _
  $region45: #{inr_encoder_forward.1} parent=0 // pred_fallthru
    _
  // Predicated region
  $region46: #{inr_encoder_forward.1} parent=0 // pred_check
    _
  $region47: #{inr_encoder_forward.1} parent=0 // pred_check_branch
    %731 = sbr.rel (0) target = $region49
  $region48: #{inr_encoder_forward.1} parent=0 // pred_region
    _
  $region49: #{inr_encoder_forward.1} parent=0 // pred_fallthru
    _
  // Predicated region
  $region50: #{inr_encoder_forward.1} parent=0 // pred_check
    _
  $region51: #{inr_encoder_forward.1} parent=0 // pred_check_branch
    %733 = sbr.rel (0) target = $region53
  $region52: #{inr_encoder_forward.1} parent=0 // pred_region
    _
  $region53: #{inr_encoder_forward.1} parent=0 // pred_fallthru
    _
  // Predicated region
  $region54: #{inr_encoder_forward.1} parent=0 // pred_check
    _
  $region55: #{inr_encoder_forward.1} parent=0 // pred_check_branch
    %735 = sbr.rel (0) target = $region57
  $region56: #{inr_encoder_forward.1} parent=0 // pred_region
    _
  $region57: #{inr_encoder_forward.1} parent=0 // pred_fallthru
    _

</llo_original>
